<compile_context>
chip_gen: v7x
topology: tpu7x:2x2x1
jax: 0.10.0
libtpu: 0.0.40
codegen_flags: <defaults>
</compile_context>

<pallas_src>
import functools

import jax
import jax.numpy as jnp
from jax.experimental import pallas as pl
from jax.experimental.pallas import tpu as pltpu


def _edge_gat_kernel(logits_ref, elT_ref, er_ref, feat_ref, res_ref, bias_ref,
                     out_ref, *, num_heads, out_feats):
    H, F = num_heads, out_feats

    # ---- attention logits (mask already folded into logits as -1e30 fill) ----
    e = logits_ref[...]                               # (H, TD, V) f32
    e = e + elT_ref[...][:, None, :]                  # + <feat_i, a_l>  (all sources)
    e = e + er_ref[...].T[:, :, None]                 # + <feat_j, a_r>  (dst tile)
    e = jnp.where(e >= 0, e, 0.2 * e)                 # LeakyReLU(0.2)

    # ---- edge-softmax over incoming edges (sources on lanes, f32) ----
    e_max = jnp.max(e, axis=-1, keepdims=True)        # (H, TD, 1)
    p = jnp.exp(e - e_max)                            # masked slots underflow to 0
    denom = jnp.maximum(jnp.sum(p, axis=-1, keepdims=True), 1e-30)
    inv = pl.reciprocal(denom, approx=True)           # (H, TD, 1), EUP slot

    # ---- message passing: per-head MXU matmul with UNnormalized weights, ----
    # ---- then a cheap (TD, F) rescale; concatenate lane-dense and store.  ----
    p_bf = p.astype(jnp.bfloat16)
    feat = feat_ref[...]                              # (V, HF) bf16, resident
    heads = []
    for h in range(H):                                # static unroll (H small)
        acc = jnp.dot(p_bf[h], feat[:, h * F:(h + 1) * F],
                      preferred_element_type=jnp.float32)   # (TD, F)
        heads.append(acc * inv[h])                    # normalize after the matmul
    rst = jnp.concatenate(heads, axis=-1)             # (TD, HF)

    out_ref[...] = rst + res_ref[...] + bias_ref[...]  # single 128-wide store


def _vmem_budget_bytes():
    """Generation-aware VMEM budget (v5e/v6e: 128 MiB, v7x: 64 MiB per TC)."""
    try:
        cap = int(pltpu.get_tpu_info().vmem_capacity_bytes)
    except Exception:  # pragma: no cover - conservative fallback
        cap = 64 * 2 ** 20
    return min(int(cap * 0.75), 96 * 2 ** 20)


def _pick_tile_d(V, H, F, budget=None):
    """Largest dst tile that divides V, is (8,128)-legal and fits the VMEM budget,
    preferring grids of length >= 2 so v7x's two TensorCores both get work."""
    if budget is None:
        budget = _vmem_budget_bytes()
    HF = H * F

    def footprint(t):
        logits_tile = H * t * V * 4                 # f32 dense-logit tile
        small_tiles = t * (H + 2 * HF) * 4          # er + res + out tiles (f32)
        pipelined = 2 * (logits_tile + small_tiles)  # double-buffered streams
        resident = V * HF * 2 + H * V * 4 + HF * 4   # feat_src(bf16) + elT + bias
        temps = 3 * H * t * V * 4                    # e / p / headroom (f32)
        return pipelined + resident + temps

    cands = sorted({t for t in range(8, V + 1, 8) if V % t == 0} | {V},
                   reverse=True)
    fitting = [t for t in cands if footprint(t) <= budget]
    if not fitting:
        return cands[-1]
    for t in fitting:
        if V // t >= 2:
            return t
    return fitting[0]


def gat_layer_flatten(node_feats, edge_src, edge_dst, edge_feats, params,
                      *, tile_d=None, feat_dtype=jnp.bfloat16):
    """GATLayer forward (agg_mode='flatten'). Returns (V, num_heads*out_feats) f32."""
    V, _Din = node_feats.shape
    E, _Ein = edge_feats.shape
    H, F = params['attn_l'].shape
    HF = H * F

    w_fc, w_res, w_edge = params['w_fc'], params['w_res'], params['w_edge']
    x = node_feats.astype(jnp.float32)

    # ---- one-time host-side (XLA) projections; nothing is recomputed per tile ----
    feat = x @ w_fc                                                    # (V, HF)
    el = (feat.reshape(V, H, F) * params['attn_l'][None]).sum(-1)      # (V, H)
    er = (feat.reshape(V, H, F) * params['attn_r'][None]).sum(-1)      # (V, H)
    res = x @ w_res                                                    # (V, HF)
    fe = edge_feats.astype(jnp.float32) @ w_edge                       # (E, HF)
    ee = (fe.reshape(E, H, F) * params['attn_e'][None]).sum(-1)        # (E, H)

    # ---- densify per-edge logits; adjacency mask folded in as -1e30 fill ----
    NEG = jnp.float32(-1e30)
    logits = jnp.full((V, V, H), NEG, jnp.float32).at[edge_dst, edge_src].set(ee)
    logits = jnp.transpose(logits, (2, 0, 1))          # (H, Vdst, Vsrc), lane-dense over src

    feat_bf = feat.astype(feat_dtype)                  # (V, HF) message features (MXU RHS)
    elT = el.T                                         # (H, V)
    bias = params['bias'].reshape(1, HF).astype(jnp.float32)

    if tile_d is None:
        tile_d = _pick_tile_d(V, H, F)
    assert V % tile_d == 0 and (tile_d % 8 == 0 or tile_d == V)
    grid = (V // tile_d,)

    kernel = functools.partial(_edge_gat_kernel, num_heads=H, out_feats=F)
    out = pl.pallas_call(
        kernel,
        out_shape=jax.ShapeDtypeStruct((V, HF), jnp.float32),
        grid=grid,
        in_specs=[
            pl.BlockSpec((H, tile_d, V), lambda i: (0, i, 0)),   # masked edge logits (bulk stream)
            pl.BlockSpec((H, V), lambda i: (0, 0)),              # el for all sources (resident)
            pl.BlockSpec((tile_d, H), lambda i: (i, 0)),         # er for dst tile
            pl.BlockSpec((V, HF), lambda i: (0, 0)),             # source features bf16 (resident)
            pl.BlockSpec((tile_d, HF), lambda i: (i, 0)),        # residual projection of dst tile
            pl.BlockSpec((1, HF), lambda i: (0, 0)),             # bias
        ],
        out_specs=pl.BlockSpec((tile_d, HF), lambda i: (i, 0)),
        compiler_params=pltpu.CompilerParams(
            dimension_semantics=("parallel",),        # dst tiles independent (megacore)
            vmem_limit_bytes=_vmem_budget_bytes()),
    )(logits, elT, er, feat_bf, res, bias)
    return out


def _reference(node_feats, edge_src, edge_dst, edge_feats, params):
    """Pure-JAX sparse reference with DGL EdgeGATConv semantics (eval mode, f32)."""
    H, F = params['attn_l'].shape
    V = node_feats.shape[0]
    feat = (node_feats @ params['w_fc']).reshape(V, H, F)
    el = (feat * params['attn_l']).sum(-1)
    er = (feat * params['attn_r']).sum(-1)
    fe = (edge_feats @ params['w_edge']).reshape(-1, H, F)
    ee = (fe * params['attn_e']).sum(-1)
    e = el[edge_src] + er[edge_dst] + ee
    e = jnp.where(e >= 0, e, 0.2 * e)
    emax = jnp.full((V, H), -jnp.inf).at[edge_dst].max(e)
    p = jnp.exp(e - emax[edge_dst])
    denom = jnp.zeros((V, H)).at[edge_dst].add(p)
    a = p / denom[edge_dst]
    msg = a[:, :, None] * feat[edge_src]
    rst = jnp.zeros((V, H, F)).at[edge_dst].add(msg)
    res = node_feats @ params['w_res']
    return rst.reshape(V, H * F) + res + params['bias'][None, :]


if __name__ == "__main__":
    key = jax.random.PRNGKey(0)
    V, node_in, edge_in, out_feats, num_heads = 16, 32, 16, 32, 4
    HF = out_feats * num_heads

    # graph: self-loops + ring, so every node has in-degree >= 1 (DGL requires it)
    ids = jnp.arange(V, dtype=jnp.int32)
    edge_src = jnp.concatenate([ids, (ids + 1) % V])
    edge_dst = jnp.concatenate([ids, ids])
    E = int(edge_src.shape[0])

    ks = jax.random.split(key, 9)
    node_feats = jax.random.normal(ks[0], (V, node_in), jnp.float32)
    edge_feats = jax.random.normal(ks[1], (E, edge_in), jnp.float32)
    params = dict(
        w_fc=0.1 * jax.random.normal(ks[2], (node_in, HF), jnp.float32),
        w_edge=0.1 * jax.random.normal(ks[3], (edge_in, HF), jnp.float32),
        attn_l=0.1 * jax.random.normal(ks[4], (num_heads, out_feats), jnp.float32),
        attn_r=0.1 * jax.random.normal(ks[5], (num_heads, out_feats), jnp.float32),
        attn_e=0.1 * jax.random.normal(ks[6], (num_heads, out_feats), jnp.float32),
        w_res=0.1 * jax.random.normal(ks[7], (node_in, HF), jnp.float32),
        bias=0.01 * jax.random.normal(ks[8], (HF,), jnp.float32),
    )

    # tile_d=8 -> grid of 2 destination tiles, exercising the pipelined/tiled path.
    out = gat_layer_flatten(node_feats, edge_src, edge_dst, edge_feats, params,
                            tile_d=8)
    out = jax.block_until_ready(out)

    ref = _reference(node_feats, edge_src, edge_dst, edge_feats, params)
    assert out.shape == (V, HF)
    err = float(jnp.max(jnp.abs(out - ref)))
    # Tolerance reflects bf16 message features / bf16 attention weights on the MXU
    # and the approximate EUP reciprocal; structural bugs would give O(0.1-1) errors.
    assert jnp.allclose(out, ref, rtol=2e-2, atol=2e-2), err
    print("KERNEL_OK")
</pallas_src>

<mosaic_0001>
module attributes {stable_mosaic.version = 11 : i64} {
  func.func @_edge_gat_kernel(%arg0: i32, %arg1: memref<4x8x16xf32, #tpu.memory_space<vmem>>, %arg2: memref<4x16xf32, #tpu.memory_space<vmem>>, %arg3: memref<8x4xf32, #tpu.memory_space<vmem>>, %arg4: memref<16x128xbf16, #tpu.memory_space<vmem>>, %arg5: memref<8x128xf32, #tpu.memory_space<vmem>>, %arg6: memref<1x128xf32, #tpu.memory_space<vmem>>, %arg7: memref<8x128xf32, #tpu.memory_space<vmem>>) attributes {dimension_semantics = [#tpu.dimension_semantics<parallel>], iteration_bounds = array<i64: 2>, scalar_prefetch = 0 : i64, scratch_operands = 0 : i64, tpu.core_type = #tpu.core_type<tc>, window_params = [{transform_indices = @transform_0, window_bounds = array<i64: 4, 8, 16>}, {pipeline_mode = #tpu.pipeline_mode<synchronous>, transform_indices = @transform_1, window_bounds = array<i64: 4, 16>}, {transform_indices = @transform_2, window_bounds = array<i64: 8, 4>}, {pipeline_mode = #tpu.pipeline_mode<synchronous>, transform_indices = @transform_3, window_bounds = array<i64: 16, 128>}, {transform_indices = @transform_4, window_bounds = array<i64: 8, 128>}, {pipeline_mode = #tpu.pipeline_mode<synchronous>, transform_indices = @transform_5, window_bounds = array<i64: 1, 128>}, {transform_indices = @transform_6, window_bounds = array<i64: 8, 128>}]} {
    %c0 = arith.constant 0 : index
    %c0_0 = arith.constant 0 : index
    %c0_1 = arith.constant 0 : index
    %0 = vector.load %arg1[%c0, %c0_0, %c0_1] : memref<4x8x16xf32, #tpu.memory_space<vmem>>, vector<4x8x16xf32>
    %c0_2 = arith.constant 0 : index
    %c0_3 = arith.constant 0 : index
    %1 = vector.load %arg2[%c0_2, %c0_3] : memref<4x16xf32, #tpu.memory_space<vmem>>, vector<4x16xf32>
    %2 = vector.shape_cast %1 : vector<4x16xf32> to vector<4x1x16xf32>
    %3 = vector.broadcast %2 : vector<4x1x16xf32> to vector<4x8x16xf32>
    %4 = arith.addf %0, %3 : vector<4x8x16xf32>
    %c0_4 = arith.constant 0 : index
    %c0_5 = arith.constant 0 : index
    %5 = vector.load %arg3[%c0_4, %c0_5] : memref<8x4xf32, #tpu.memory_space<vmem>>, vector<8x4xf32>
    %6 = tpu.transpose %5, [1, 0] : vector<8x4xf32> -> vector<4x8xf32>
    %7 = vector.shape_cast %6 : vector<4x8xf32> to vector<4x8x1xf32>
    %8 = vector.broadcast %7 : vector<4x8x1xf32> to vector<4x8x16xf32>
    %9 = arith.addf %4, %8 : vector<4x8x16xf32>
    %cst = arith.constant 0.000000e+00 : f32
    %10 = vector.broadcast %cst : f32 to vector<4x8x16xf32>
    %11 = arith.cmpf oge, %9, %10 : vector<4x8x16xf32>
    %cst_6 = arith.constant 2.000000e-01 : f32
    %12 = vector.broadcast %cst_6 : f32 to vector<4x8x16xf32>
    %13 = arith.mulf %12, %9 : vector<4x8x16xf32>
    %14 = arith.select %11, %9, %13 : vector<4x8x16xi1>, vector<4x8x16xf32>
    %cst_7 = arith.constant dense<0xFF800000> : vector<4x8xf32>
    %15 = vector.multi_reduction <maximumf>, %14, %cst_7 [2] : vector<4x8x16xf32> to vector<4x8xf32>
    %16 = vector.shape_cast %15 : vector<4x8xf32> to vector<4x8x1xf32>
    %17 = vector.broadcast %16 : vector<4x8x1xf32> to vector<4x8x16xf32>
    %18 = arith.subf %14, %17 : vector<4x8x16xf32>
    %19 = math.exp %18 : vector<4x8x16xf32>
    %cst_8 = arith.constant dense<0.000000e+00> : vector<4x8xf32>
    %20 = vector.multi_reduction <add>, %19, %cst_8 [2] : vector<4x8x16xf32> to vector<4x8xf32>
    %21 = vector.shape_cast %20 : vector<4x8xf32> to vector<4x8x1xf32>
    %cst_9 = arith.constant 1.000000e-30 : f32
    %22 = vector.broadcast %cst_9 : f32 to vector<4x8x1xf32>
    %23 = arith.maximumf %21, %22 : vector<4x8x1xf32>
    %24 = tpu.reciprocal %23 {approx = true} : vector<4x8x1xf32> -> vector<4x8x1xf32>
    %25 = arith.truncf %19 : vector<4x8x16xf32> to vector<4x8x16xbf16>
    %c0_10 = arith.constant 0 : index
    %c0_11 = arith.constant 0 : index
    %26 = vector.load %arg4[%c0_10, %c0_11] : memref<16x128xbf16, #tpu.memory_space<vmem>>, vector<16x128xbf16>
    %27 = vector.extract_strided_slice %25 {offsets = [0, 0, 0], sizes = [1, 8, 16], strides = [1, 1, 1]} : vector<4x8x16xbf16> to vector<1x8x16xbf16>
    %28 = vector.shape_cast %27 : vector<1x8x16xbf16> to vector<8x16xbf16>
    %29 = vector.extract_strided_slice %26 {offsets = [0, 0], sizes = [16, 32], strides = [1, 1]} : vector<16x128xbf16> to vector<16x32xbf16>
    %cst_12 = arith.constant dense<0.000000e+00> : vector<8x32xf32>
    %30 = tpu.matmul %28, %29, %cst_12 {dimension_numbers = #tpu.dot_dimension_numbers<[1], [0], [0], [1], [0, 0, 1, 1], [], []>} : vector<8x16xbf16>, vector<16x32xbf16>, vector<8x32xf32> -> vector<8x32xf32>
    %31 = vector.extract_strided_slice %24 {offsets = [0, 0, 0], sizes = [1, 8, 1], strides = [1, 1, 1]} : vector<4x8x1xf32> to vector<1x8x1xf32>
    %32 = vector.shape_cast %31 : vector<1x8x1xf32> to vector<8x1xf32>
    %33 = vector.broadcast %32 : vector<8x1xf32> to vector<8x32xf32>
    %34 = arith.mulf %30, %33 : vector<8x32xf32>
    %35 = vector.extract_strided_slice %25 {offsets = [1, 0, 0], sizes = [1, 8, 16], strides = [1, 1, 1]} : vector<4x8x16xbf16> to vector<1x8x16xbf16>
    %36 = vector.shape_cast %35 : vector<1x8x16xbf16> to vector<8x16xbf16>
    %37 = vector.extract_strided_slice %26 {offsets = [0, 32], sizes = [16, 32], strides = [1, 1]} : vector<16x128xbf16> to vector<16x32xbf16>
    %cst_13 = arith.constant dense<0.000000e+00> : vector<8x32xf32>
    %38 = tpu.matmul %36, %37, %cst_13 {dimension_numbers = #tpu.dot_dimension_numbers<[1], [0], [0], [1], [0, 0, 1, 1], [], []>} : vector<8x16xbf16>, vector<16x32xbf16>, vector<8x32xf32> -> vector<8x32xf32>
    %39 = vector.extract_strided_slice %24 {offsets = [1, 0, 0], sizes = [1, 8, 1], strides = [1, 1, 1]} : vector<4x8x1xf32> to vector<1x8x1xf32>
    %40 = vector.shape_cast %39 : vector<1x8x1xf32> to vector<8x1xf32>
    %41 = vector.broadcast %40 : vector<8x1xf32> to vector<8x32xf32>
    %42 = arith.mulf %38, %41 : vector<8x32xf32>
    %43 = vector.extract_strided_slice %25 {offsets = [2, 0, 0], sizes = [1, 8, 16], strides = [1, 1, 1]} : vector<4x8x16xbf16> to vector<1x8x16xbf16>
    %44 = vector.shape_cast %43 : vector<1x8x16xbf16> to vector<8x16xbf16>
    %45 = vector.extract_strided_slice %26 {offsets = [0, 64], sizes = [16, 32], strides = [1, 1]} : vector<16x128xbf16> to vector<16x32xbf16>
    %cst_14 = arith.constant dense<0.000000e+00> : vector<8x32xf32>
    %46 = tpu.matmul %44, %45, %cst_14 {dimension_numbers = #tpu.dot_dimension_numbers<[1], [0], [0], [1], [0, 0, 1, 1], [], []>} : vector<8x16xbf16>, vector<16x32xbf16>, vector<8x32xf32> -> vector<8x32xf32>
    %47 = vector.extract_strided_slice %24 {offsets = [2, 0, 0], sizes = [1, 8, 1], strides = [1, 1, 1]} : vector<4x8x1xf32> to vector<1x8x1xf32>
    %48 = vector.shape_cast %47 : vector<1x8x1xf32> to vector<8x1xf32>
    %49 = vector.broadcast %48 : vector<8x1xf32> to vector<8x32xf32>
    %50 = arith.mulf %46, %49 : vector<8x32xf32>
    %51 = vector.extract_strided_slice %25 {offsets = [3, 0, 0], sizes = [1, 8, 16], strides = [1, 1, 1]} : vector<4x8x16xbf16> to vector<1x8x16xbf16>
    %52 = vector.shape_cast %51 : vector<1x8x16xbf16> to vector<8x16xbf16>
    %53 = vector.extract_strided_slice %26 {offsets = [0, 96], sizes = [16, 32], strides = [1, 1]} : vector<16x128xbf16> to vector<16x32xbf16>
    %cst_15 = arith.constant dense<0.000000e+00> : vector<8x32xf32>
    %54 = tpu.matmul %52, %53, %cst_15 {dimension_numbers = #tpu.dot_dimension_numbers<[1], [0], [0], [1], [0, 0, 1, 1], [], []>} : vector<8x16xbf16>, vector<16x32xbf16>, vector<8x32xf32> -> vector<8x32xf32>
    %55 = vector.extract_strided_slice %24 {offsets = [3, 0, 0], sizes = [1, 8, 1], strides = [1, 1, 1]} : vector<4x8x1xf32> to vector<1x8x1xf32>
    %56 = vector.shape_cast %55 : vector<1x8x1xf32> to vector<8x1xf32>
    %57 = vector.broadcast %56 : vector<8x1xf32> to vector<8x32xf32>
    %58 = arith.mulf %54, %57 : vector<8x32xf32>
    %59 = tpu.concatenate %34, %42, %50, %58 in 1 : vector<8x32xf32>, vector<8x32xf32>, vector<8x32xf32>, vector<8x32xf32> -> vector<8x128xf32>
    %c0_16 = arith.constant 0 : index
    %c0_17 = arith.constant 0 : index
    %60 = vector.load %arg5[%c0_16, %c0_17] : memref<8x128xf32, #tpu.memory_space<vmem>>, vector<8x128xf32>
    %61 = arith.addf %59, %60 : vector<8x128xf32>
    %c0_18 = arith.constant 0 : index
    %c0_19 = arith.constant 0 : index
    %62 = vector.load %arg6[%c0_18, %c0_19] : memref<1x128xf32, #tpu.memory_space<vmem>>, vector<1x128xf32>
    %63 = vector.broadcast %62 : vector<1x128xf32> to vector<8x128xf32>
    %64 = arith.addf %61, %63 : vector<8x128xf32>
    %c0_20 = arith.constant 0 : index
    %c0_21 = arith.constant 0 : index
    %65 = vector.load %arg7[%c0_20, %c0_21] : memref<8x128xf32, #tpu.memory_space<vmem>>, vector<8x128xf32>
    tpu.vector_store %arg7[%c0_20, %c0_21], %64 {strides = array<i32>} : memref<8x128xf32, #tpu.memory_space<vmem>>, vector<8x128xf32>,
    return
  }
  func.func @transform_0(%arg0: i32) -> (i32, i32, i32) {
    %c0_i32 = arith.constant 0 : i32
    %c0_i32_0 = arith.constant 0 : i32
    %c0_i32_1 = arith.constant 0 : i32
    return %c0_i32, %arg0, %c0_i32_0 : i32, i32, i32
  }
  func.func @transform_1(%arg0: i32) -> (i32, i32) {
    %c0_i32 = arith.constant 0 : i32
    %c0_i32_0 = arith.constant 0 : i32
    %c0_i32_1 = arith.constant 0 : i32
    return %c0_i32, %c0_i32_0 : i32, i32
  }
  func.func @transform_2(%arg0: i32) -> (i32, i32) {
    %c0_i32 = arith.constant 0 : i32
    %c0_i32_0 = arith.constant 0 : i32
    return %arg0, %c0_i32 : i32, i32
  }
  func.func @transform_3(%arg0: i32) -> (i32, i32) {
    %c0_i32 = arith.constant 0 : i32
    %c0_i32_0 = arith.constant 0 : i32
    %c0_i32_1 = arith.constant 0 : i32
    return %c0_i32, %c0_i32_0 : i32, i32
  }
  func.func @transform_4(%arg0: i32) -> (i32, i32) {
    %c0_i32 = arith.constant 0 : i32
    %c0_i32_0 = arith.constant 0 : i32
    return %arg0, %c0_i32 : i32, i32
  }
  func.func @transform_5(%arg0: i32) -> (i32, i32) {
    %c0_i32 = arith.constant 0 : i32
    %c0_i32_0 = arith.constant 0 : i32
    %c0_i32_1 = arith.constant 0 : i32
    return %c0_i32, %c0_i32_0 : i32, i32
  }
  func.func @transform_6(%arg0: i32) -> (i32, i32) {
    %c0_i32 = arith.constant 0 : i32
    %c0_i32_0 = arith.constant 0 : i32
    return %arg0, %c0_i32 : i32, i32
  }
}

</mosaic_0001>

<llo_original>
// kernel: tpu_custom_call.1
$region0: #{tpu_custom_call.1}
  #allocation0 [shape = 'u32[]', space=smem, size = 0x4, offset = 0x4, fixed_abs, tag = 'smem constant byte address 0x4 - core index']
  #allocation1 [shape = 'u32[144,128]{1,0:T(1,128)}', space=vmem, size = 0x12000, scoped, tag = 'internal scratch']
  %s0 = inlined_call_operand.hbm [shape: f32[4,16,16], index: 0, kind: input, shape index: {}]
  %s1 = inlined_call_operand.vmem [shape: f32[4,16], index: 1, kind: input, shape index: {}]
  %s2 = inlined_call_operand.vmem [shape: f32[16,4], index: 2, kind: input, shape index: {}]
  %s3 = inlined_call_operand.vmem [shape: bf16[16,128], index: 3, kind: input, shape index: {}]
  %s4 = inlined_call_operand.vmem [shape: f32[16,128], index: 4, kind: input, shape index: {}]
  %s5 = inlined_call_operand.vmem [shape: f32[1,128], index: 5, kind: input, shape index: {}]
  %s6 = inlined_call_operand.hbm [shape: f32[16,128], index: 6, kind: output, shape index: {}]
  %s7 = sld [smem:[#allocation0]]
  $region61: #{tpu_custom_call.1} parent=0
    _
  %s9 = ssub.s32 1, %s7
  %s10 = scalar_select 0, %s9, %s7
  $region1: #{tpu_custom_call.1} parent=0
    #allocation2 [shape = 'u8[32768]{0}', space=vmem, size = 0x8000, scoped, tag = 'input window, operand 0']
    #allocation3 [shape = 's32[2]{0}', space=sflag, size = 0x8, scoped, tag = 'scoped memory for tpu_custom_call.1']
    #allocation4 [shape = 's32[2]{0}', space=sflag, size = 0x8, scoped, tag = 'scoped memory for tpu_custom_call.1']
    #allocation5 [shape = 'u8[8192]{0}', space=vmem, size = 0x2000, scoped, tag = 'output window, operand 0']
    %11 = vsyncpa [#allocation3], 0
    %s12 = scalar_lea.sflag [#allocation3], 1
    %13 = vsyncpa %s12, 0
    %14 = vsyncpa [#allocation4], 0
    %s15 = scalar_lea.sflag [#allocation4], 1
    %16 = vsyncpa %s15, 0
    loop: start=0, step=1, limit=4
    $region2: #{tpu_custom_call.1} parent=1 // loop_pre_header
      _
    $region3: #{tpu_custom_call.1} parent=1 // loop_header
      %s18 = sphi 0, %s22
      %p19 = scmp.ge.s32.totalorder %s18, 4
      %s28 = sphi 0, %s30
      %s31 = sphi 0, %s28
      %s32 = sphi 0, %s31
      %s48 = sphi 0, %s32
      %s52 = sphi 0, %s52
      %s54 = sphi 0, %s52
      %s55 = sphi 0, %s54
      %s69 = sphi 0, %s55
      %s75 = sphi 0, %s77
      %s78 = sphi 0, %s75
      %s79 = sphi 0, %s78
      %s95 = sphi 0, %s79
      %s99 = sphi 0, %s99
      %s101 = sphi 0, %s99
      %s102 = sphi 0, %s101
      %s116 = sphi 0, %s102
      %s122 = sphi 0, %s124
      %s125 = sphi 0, %s122
      %s126 = sphi 0, %s125
      %s142 = sphi 0, %s126
      %s146 = sphi 0, %s146
      %s148 = sphi 0, %s146
      %s149 = sphi 0, %s148
      %s163 = sphi 0, %s149
      %s169 = sphi 0, %s171
      %s172 = sphi 0, %s169
      %s173 = sphi 0, %s172
      %s189 = sphi 0, %s173
    $region4: #{tpu_custom_call.1} parent=1 // loop_header_branch
      %21 = sbr.rel (%p19) target = $region8
    $region5: #{tpu_custom_call.1} parent=1 // loop_body
      %s23 = ssub.s32 %s18, 1
      %s24 = ssub.s32 %s18, 2
      %s25 = sadd.s32 %s18, 1
      %s26 = ssub.s32 %s18, %s25
      %p27 = scmp.eq.s32.totalorder %s26, 0
      %s29 = sadd.s32 %s28, 1
      %s30 = scalar_select %p27, %s28, %s29
      %p33 = pneg %p27
      %p34 = scmp.eq.s32.totalorder %s18, 1
      %p35 = por %p33, %p34
      %p36 = scmp.ne.s32.totalorder %s28, %s31
      %p37 = scmp.eq.s32.totalorder %s18, 0
      %p38 = por %p36, %p37
      %p39 = scmp.ne.s32.totalorder %s28, %s31
      %p40 = scmp.eq.s32.totalorder %s23, 1
      %p41 = por %p39, %p40
      %p42 = scmp.ne.s32.totalorder %s31, %s32
      %p43 = scmp.eq.s32.totalorder %s23, 0
      %p44 = por %p42, %p43
      %p45 = scmp.ne.s32.totalorder %s31, %s32
      %p46 = scmp.eq.s32.totalorder %s24, 1
      %p47 = por %p45, %p46
      %p49 = scmp.ne.s32.totalorder %s32, %s48
      %p50 = scmp.eq.s32.totalorder %s24, 0
      %p51 = por %p49, %p50
      %s53 = sadd.s32 %s52, 1
      %p56 = scmp.eq.s32.totalorder %s18, 1
      %p57 = scmp.ne.s32.totalorder %s52, %s54
      %p58 = scmp.eq.s32.totalorder %s18, 0
      %p59 = por %p57, %p58
      %p60 = scmp.ne.s32.totalorder %s52, %s54
      %p61 = scmp.eq.s32.totalorder %s23, 1
      %p62 = por %p60, %p61
      %p63 = scmp.ne.s32.totalorder %s54, %s55
      %p64 = scmp.eq.s32.totalorder %s23, 0
      %p65 = por %p63, %p64
      %p66 = scmp.ne.s32.totalorder %s54, %s55
      %p67 = scmp.eq.s32.totalorder %s24, 1
      %p68 = por %p66, %p67
      %p70 = scmp.ne.s32.totalorder %s55, %s69
      %p71 = scmp.eq.s32.totalorder %s24, 0
      %p72 = por %p70, %p71
      %s73 = ssub.s32 %s18, %s25
      %p74 = scmp.eq.s32.totalorder %s73, 0
      %s76 = sadd.s32 %s75, 1
      %s77 = scalar_select %p74, %s75, %s76
      %p80 = pneg %p74
      %p81 = scmp.eq.s32.totalorder %s18, 1
      %p82 = por %p80, %p81
      %p83 = scmp.ne.s32.totalorder %s75, %s78
      %p84 = scmp.eq.s32.totalorder %s18, 0
      %p85 = por %p83, %p84
      %p86 = scmp.ne.s32.totalorder %s75, %s78
      %p87 = scmp.eq.s32.totalorder %s23, 1
      %p88 = por %p86, %p87
      %p89 = scmp.ne.s32.totalorder %s78, %s79
      %p90 = scmp.eq.s32.totalorder %s23, 0
      %p91 = por %p89, %p90
      %p92 = scmp.ne.s32.totalorder %s78, %s79
      %p93 = scmp.eq.s32.totalorder %s24, 1
      %p94 = por %p92, %p93
      %p96 = scmp.ne.s32.totalorder %s79, %s95
      %p97 = scmp.eq.s32.totalorder %s24, 0
      %p98 = por %p96, %p97
      %s100 = sadd.s32 %s99, 1
      %p103 = scmp.eq.s32.totalorder %s18, 1
      %p104 = scmp.ne.s32.totalorder %s99, %s101
      %p105 = scmp.eq.s32.totalorder %s18, 0
      %p106 = por %p104, %p105
      %p107 = scmp.ne.s32.totalorder %s99, %s101
      %p108 = scmp.eq.s32.totalorder %s23, 1
      %p109 = por %p107, %p108
      %p110 = scmp.ne.s32.totalorder %s101, %s102
      %p111 = scmp.eq.s32.totalorder %s23, 0
      %p112 = por %p110, %p111
      %p113 = scmp.ne.s32.totalorder %s101, %s102
      %p114 = scmp.eq.s32.totalorder %s24, 1
      %p115 = por %p113, %p114
      %p117 = scmp.ne.s32.totalorder %s102, %s116
      %p118 = scmp.eq.s32.totalorder %s24, 0
      %p119 = por %p117, %p118
      %s120 = ssub.s32 %s18, %s25
      %p121 = scmp.eq.s32.totalorder %s120, 0
      %s123 = sadd.s32 %s122, 1
      %s124 = scalar_select %p121, %s122, %s123
      %p127 = pneg %p121
      %p128 = scmp.eq.s32.totalorder %s18, 1
      %p129 = por %p127, %p128
      %p130 = scmp.ne.s32.totalorder %s122, %s125
      %p131 = scmp.eq.s32.totalorder %s18, 0
      %p132 = por %p130, %p131
      %p133 = scmp.ne.s32.totalorder %s122, %s125
      %p134 = scmp.eq.s32.totalorder %s23, 1
      %p135 = por %p133, %p134
      %p136 = scmp.ne.s32.totalorder %s125, %s126
      %p137 = scmp.eq.s32.totalorder %s23, 0
      %p138 = por %p136, %p137
      %p139 = scmp.ne.s32.totalorder %s125, %s126
      %p140 = scmp.eq.s32.totalorder %s24, 1
      %p141 = por %p139, %p140
      %p143 = scmp.ne.s32.totalorder %s126, %s142
      %p144 = scmp.eq.s32.totalorder %s24, 0
      %p145 = por %p143, %p144
      %s147 = sadd.s32 %s146, 1
      %p150 = scmp.eq.s32.totalorder %s18, 1
      %p151 = scmp.ne.s32.totalorder %s146, %s148
      %p152 = scmp.eq.s32.totalorder %s18, 0
      %p153 = por %p151, %p152
      %p154 = scmp.ne.s32.totalorder %s146, %s148
      %p155 = scmp.eq.s32.totalorder %s23, 1
      %p156 = por %p154, %p155
      %p157 = scmp.ne.s32.totalorder %s148, %s149
      %p158 = scmp.eq.s32.totalorder %s23, 0
      %p159 = por %p157, %p158
      %p160 = scmp.ne.s32.totalorder %s148, %s149
      %p161 = scmp.eq.s32.totalorder %s24, 1
      %p162 = por %p160, %p161
      %p164 = scmp.ne.s32.totalorder %s149, %s163
      %p165 = scmp.eq.s32.totalorder %s24, 0
      %p166 = por %p164, %p165
      %s167 = ssub.s32 %s18, %s25
      %p168 = scmp.eq.s32.totalorder %s167, 0
      %s170 = sadd.s32 %s169, 1
      %s171 = scalar_select %p168, %s169, %s170
      %p174 = pneg %p168
      %p175 = scmp.eq.s32.totalorder %s18, 1
      %p176 = por %p174, %p175
      %p177 = scmp.ne.s32.totalorder %s169, %s172
      %p178 = scmp.eq.s32.totalorder %s18, 0
      %p179 = por %p177, %p178
      %p180 = scmp.ne.s32.totalorder %s169, %s172
      %p181 = scmp.eq.s32.totalorder %s23, 1
      %p182 = por %p180, %p181
      %p183 = scmp.ne.s32.totalorder %s172, %s173
      %p184 = scmp.eq.s32.totalorder %s23, 0
      %p185 = por %p183, %p184
      %p186 = scmp.ne.s32.totalorder %s172, %s173
      %p187 = scmp.eq.s32.totalorder %s24, 1
      %p188 = por %p186, %p187
      %p190 = scmp.ne.s32.totalorder %s173, %s189
      %p191 = scmp.eq.s32.totalorder %s24, 0
      %p192 = por %p190, %p191
      %p193 = scmp.le.s32.totalorder 1, %s18
      %p194 = scmp.lt.s32.totalorder %s18, 3
      %p195 = pnand %p193, %p194
      %p196 = pneg %p195
      // Predicated region
      $region9: #{tpu_custom_call.1} parent=5 // pred_check
        _
      $region10: #{tpu_custom_call.1} parent=5 // pred_check_branch
        %198 = sbr.rel (%p195) target = $region12
      $region11: #{tpu_custom_call.1} parent=5 // pred_region
        %s199 = ssub.s32 %s18, 1
        // Predicated region
        $region13: #{tpu_custom_call.1} parent=11 // pred_check
          %p200 = pneg %p65
        $region14: #{tpu_custom_call.1} parent=11 // pred_check_branch
          %202 = sbr.rel (%p200) target = $region16
        $region15: #{tpu_custom_call.1} parent=11 // pred_region
          _
        $region16: #{tpu_custom_call.1} parent=11 // pred_fallthru
          _
        // Predicated region
        $region17: #{tpu_custom_call.1} parent=11 // pred_check
          %p203 = pneg %p112
        $region18: #{tpu_custom_call.1} parent=11 // pred_check_branch
          %205 = sbr.rel (%p203) target = $region20
        $region19: #{tpu_custom_call.1} parent=11 // pred_region
          _
        $region20: #{tpu_custom_call.1} parent=11 // pred_fallthru
          _
        // Predicated region
        $region21: #{tpu_custom_call.1} parent=11 // pred_check
          %p206 = pneg %p159
        $region22: #{tpu_custom_call.1} parent=11 // pred_check_branch
          %208 = sbr.rel (%p206) target = $region24
        $region23: #{tpu_custom_call.1} parent=11 // pred_region
          _
        $region24: #{tpu_custom_call.1} parent=11 // pred_fallthru
          _
      $region12: #{tpu_custom_call.1} parent=5 // pred_fallthru
        _
      %p209 = scmp.lt.s32.totalorder %s18, 2
      // Predicated region
      $region25: #{tpu_custom_call.1} parent=5 // pred_check
        %p210 = pneg %p209
      $region26: #{tpu_custom_call.1} parent=5 // pred_check_branch
        %212 = sbr.rel (%p210) target = $region28
      $region27: #{tpu_custom_call.1} parent=5 // pred_region
        // Predicated region
        $region29: #{tpu_custom_call.1} parent=27 // pred_check
          %p213 = pneg %p38
        $region30: #{tpu_custom_call.1} parent=27 // pred_check_branch
          %215 = sbr.rel (%p213) target = $region32
        $region31: #{tpu_custom_call.1} parent=27 // pred_region
          %s216 = sand.u32 %s28, 1
          %s217 = scalar_lea.sflag [#allocation3], %s216
          %s218 = sand.u32 %s28, 1
          %s219 = smul.addr %s218, 32
          %s220 = scalar_lea.vmem [#allocation2], %s219
          %s222 = ssub.s32 512, 512
          %223 = vsyncadd %s217, %s222
          %s224 = smul.addr %s18, 128
          %s225 = scalar_lea.hbm %s0, %s224
          %s226 = sshll.u32 %s220, 4
          %s227 = int_to_ptr.vmem [resolvable:$true] %s226
          %232 = dma.hbm_to_vmem [thread:$0]  %s225, 512, %s227, %s217, 256, 128, 8
        $region32: #{tpu_custom_call.1} parent=27 // pred_fallthru
          _
        // Predicated region
        $region33: #{tpu_custom_call.1} parent=27 // pred_check
          %p233 = pneg %p85
        $region34: #{tpu_custom_call.1} parent=27 // pred_check_branch
          %235 = sbr.rel (%p233) target = $region36
        $region35: #{tpu_custom_call.1} parent=27 // pred_region
          %p236 = scmp.lt.s32.totalorder %s18, 1
          %s237 = scalar_select %p236, %s18, 1
          %s238 = smul.addr %s237, 8
          %s239 = scalar_lea.vmem %s2, %s238
        $region36: #{tpu_custom_call.1} parent=27 // pred_fallthru
          _
        // Predicated region
        $region37: #{tpu_custom_call.1} parent=27 // pred_check
          %p240 = pneg %p132
        $region38: #{tpu_custom_call.1} parent=27 // pred_check_branch
          %242 = sbr.rel (%p240) target = $region40
        $region39: #{tpu_custom_call.1} parent=27 // pred_region
          %p243 = scmp.lt.s32.totalorder %s18, 1
          %s244 = scalar_select %p243, %s18, 1
          %s245 = smul.addr %s244, 8
          %s246 = scalar_lea.vmem %s4, %s245
        $region40: #{tpu_custom_call.1} parent=27 // pred_fallthru
          _
      $region28: #{tpu_custom_call.1} parent=5 // pred_fallthru
        _
      %p247 = scmp.le.s32.totalorder 1, %s18
      %p248 = scmp.lt.s32.totalorder %s18, 3
      %p249 = pnand %p247, %p248
      %p250 = pneg %p249
      // Predicated region
      $region41: #{tpu_custom_call.1} parent=5 // pred_check
        _
      $region42: #{tpu_custom_call.1} parent=5 // pred_check_branch
        %252 = sbr.rel (%p249) target = $region44
      $region43: #{tpu_custom_call.1} parent=5 // pred_region
        %s253 = ssub.s32 %s18, 1
        %s254 = sand.u32 %s31, 1
        %s255 = scalar_lea.sflag [#allocation3], %s254
        %s256 = sand.u32 %s31, 1
        %s257 = smul.addr %s256, 32
        %s258 = scalar_lea.vmem [#allocation2], %s257
        // Predicated region
        $region45: #{tpu_custom_call.1} parent=43 // pred_check
          %p259 = pneg %p44
        $region46: #{tpu_custom_call.1} parent=43 // pred_check_branch
          %261 = sbr.rel (%p259) target = $region48
        $region47: #{tpu_custom_call.1} parent=43 // pred_region
          %262 = dma.done %s255, 512
        $region48: #{tpu_custom_call.1} parent=43 // pred_fallthru
          _
        %s263 = sand.u32 %s31, 1
        %s264 = scalar_lea.sflag [#allocation3], %s263
        %s265 = sand.u32 %s31, 1
        %s266 = smul.addr %s265, 32
        %s267 = scalar_lea.vmem [#allocation2], %s266
        %p268 = pneg %p44
        %p269 = pneg %p41
        %p270 = pneg %p65
        %p271 = pneg %p62
        %p272 = scmp.lt.s32.totalorder %s23, 1
        %s273 = scalar_select %p272, %s23, 1
        %s274 = smul.addr %s273, 8
        %s275 = scalar_lea.vmem %s2, %s274
        %p276 = pneg %p91
        %p277 = pneg %p88
        %p278 = pneg %p112
        %p279 = pneg %p109
        %p280 = scmp.lt.s32.totalorder %s23, 1
        %s281 = scalar_select %p280, %s23, 1
        %s282 = smul.addr %s281, 8
        %s283 = scalar_lea.vmem %s4, %s282
        %p284 = pneg %p138
        %p285 = pneg %p135
        %p286 = pneg %p159
        %p287 = pneg %p156
        %p288 = pneg %p185
        %p289 = pneg %p182
        %s290 = sand.u32 %s172, 1
        %s291 = scalar_lea.sflag [#allocation4], %s290
        %s292 = sand.u32 %s172, 1
        %s293 = smul.addr %s292, 8
        %s294 = scalar_lea.vmem [#allocation5], %s293
        %p295 = scmp.lt.s32.totalorder %s23, 1
        %s296 = scalar_select %p295, %s23, 1
        %s297 = smul.addr %s296, 8
        %s298 = scalar_lea.vmem %s2, %s297
        %p299 = scmp.lt.s32.totalorder %s23, 1
        %s300 = scalar_select %p299, %s23, 1
        %s301 = smul.addr %s300, 8
        %s302 = scalar_lea.vmem %s4, %s301
        %v304 = vld [vmem:[%s258] sm:$0xff]
        %v305 = vld [vmem:[%s258 + $0x8] sm:$0xff]
        %v306 = vld [vmem:[%s258 + $0x10] sm:$0xff]
        %v307 = vld [vmem:[%s258 + $0x18] sm:$0xff]
        %v308 = vld [vmem:[%s1] sm:$0xf]
        %v311 = vunpack.c.l.s4 1966171168
        %v312 = vunpack.c.0.s8 %v311
        %v313 = vlaneseq
        %v314 = vshrl.u32 %v313, 7
        %v315 = vsub.s32 %v312, %v314
        %v316 = vrot.slane %v308, %v315
        %v317 = vcombine.high %v316, %v316
        %v319 = vunpack.c.l.s4 1966171168
        %v320 = vunpack.c.0.s8 %v319
        %v321 = vlaneseq
        %v322 = vshrl.u32 %v321, 7
        %v323 = vsub.s32 %v320, %v322
        %v324 = vrot.slane %v316, %v323
        %v326 = vunpack.c.l.s4 1966171168
        %v327 = vunpack.c.0.s8 %v326
        %v328 = vlaneseq
        %v329 = vshrl.u32 %v328, 7
        %v330 = vsub.s32 %v327, %v329
        %v331 = vrot.slane %v317, %v330
        %v332 = vcombine.high %v324, %v324
        %v333 = vcombine.high %v331, %v331
        %v334 = vlaneseq
        %v335 = vshrl.u32 %v334, 7
        %v336 = vsub.s32 0, %v335
        %v337 = vrot.slane %v324, %v336
        %v338 = vlaneseq
        %v339 = vshrl.u32 %v338, 7
        %v340 = vsub.s32 0, %v339
        %v341 = vrot.slane %v331, %v340
        %v342 = vlaneseq
        %v343 = vshrl.u32 %v342, 7
        %v344 = vsub.s32 0, %v343
        %v345 = vrot.slane %v332, %v344
        %v346 = vlaneseq
        %v347 = vshrl.u32 %v346, 7
        %v348 = vsub.s32 0, %v347
        %v349 = vrot.slane %v333, %v348
        %v354 = vadd.f32 %v304, %v337
        %v355 = vadd.f32 %v305, %v341
        %v356 = vadd.f32 %v306, %v345
        %v357 = vadd.f32 %v307, %v349
        %v358 = vld [vmem:[%s298] sm:$0xff]
        %359 = vxpose.xlu0.b32.start [1/16] %v358, 128
        %360 = vxpose.xlu0.b32.cont [2/16] 0.0, 128
        %361 = vxpose.xlu0.b32.cont [3/16] 0.0, 128
        %362 = vxpose.xlu0.b32.cont [4/16] 0.0, 128
        %363 = vxpose.xlu0.b32.cont [5/16] 0.0, 128
        %364 = vxpose.xlu0.b32.cont [6/16] 0.0, 128
        %365 = vxpose.xlu0.b32.cont [7/16] 0.0, 128
        %366 = vxpose.xlu0.b32.cont [8/16] 0.0, 128
        %367 = vxpose.xlu0.b32.cont [9/16] 0.0, 128
        %368 = vxpose.xlu0.b32.cont [10/16] 0.0, 128
        %369 = vxpose.xlu0.b32.cont [11/16] 0.0, 128
        %370 = vxpose.xlu0.b32.cont [12/16] 0.0, 128
        %371 = vxpose.xlu0.b32.cont [13/16] 0.0, 128
        %372 = vxpose.xlu0.b32.cont [14/16] 0.0, 128
        %373 = vxpose.xlu0.b32.cont [15/16] 0.0, 128
        %374 = vxpose.xlu0.b32.end [16/16] 0.0, 128
        %v375 = vpop.trf.xlu0
        %v376 = vpop.trf.xlu0
        %v377 = vpop.trf.xlu0
        %v378 = vpop.trf.xlu0
        %v379 = vpop.trf.xlu0
        %v380 = vpop.trf.xlu0
        %v381 = vpop.trf.xlu0
        %v382 = vpop.trf.xlu0
        %v383 = vpop.trf.xlu0
        %v384 = vpop.trf.xlu0
        %v385 = vpop.trf.xlu0
        %v386 = vpop.trf.xlu0
        %v387 = vpop.trf.xlu0
        %v388 = vpop.trf.xlu0
        %v389 = vpop.trf.xlu0
        %v390 = vpop.trf.xlu0
        %v391 = vlaneseq
        %v392 = vshrl.u32 %v391, 7
        %v393 = vsub.s32 0, %v392
        %v394 = vrot.slane %v375, %v393
        %396 = vbcast.lane.b32.xlu0 %v394, 256
        %v397 = vpop.permute.xlu0 %396
        %v398 = vlaneseq
        %v399 = vshrl.u32 %v398, 7
        %v400 = vsub.s32 1, %v399
        %v401 = vrot.slane %v375, %v400
        %403 = vbcast.lane.b32.xlu0 %v401, 256
        %v404 = vpop.permute.xlu0 %403
        %v405 = vlaneseq
        %v406 = vshrl.u32 %v405, 7
        %v407 = vsub.s32 2, %v406
        %v408 = vrot.slane %v375, %v407
        %410 = vbcast.lane.b32.xlu0 %v408, 256
        %v411 = vpop.permute.xlu0 %410
        %v412 = vlaneseq
        %v413 = vshrl.u32 %v412, 7
        %v414 = vsub.s32 3, %v413
        %v415 = vrot.slane %v375, %v414
        %417 = vbcast.lane.b32.xlu0 %v415, 256
        %v418 = vpop.permute.xlu0 %417
        %v419 = vadd.f32 %v354, %v397
        %v420 = vadd.f32 %v355, %v404
        %v421 = vadd.f32 %v356, %v411
        %v422 = vadd.f32 %v357, %v418
        %vm423 = vcmp.ge.f32.partialorder %v419, 0.0
        %vm424 = vcmp.ge.f32.partialorder %v420, 0.0
        %vm425 = vcmp.ge.f32.partialorder %v421, 0.0
        %vm426 = vcmp.ge.f32.partialorder %v422, 0.0
        %v427 = vmul.f32 %v419, 0.2
        %v428 = vmul.f32 %v420, 0.2
        %v429 = vmul.f32 %v421, 0.2
        %v430 = vmul.f32 %v422, 0.2
        %v431 = vsel %vm423, %v419, %v427
        %v432 = vsel %vm424, %v420, %v428
        %v433 = vsel %vm425, %v421, %v429
        %v434 = vsel %vm426, %v422, %v430
        %vm435 = vcmask 130048
        %v436 = vsel %vm435, %v431, -inf
        %437 = vmax.xlane.f32.xlu0 %v436
        %v438 = vpop.xlane.xlu0 %437
        %v439 = vsel %vm435, %v432, -inf
        %440 = vmax.xlane.f32.xlu0 %v439
        %v441 = vpop.xlane.xlu0 %440
        %v442 = vsel %vm435, %v433, -inf
        %443 = vmax.xlane.f32.xlu0 %v442
        %v444 = vpop.xlane.xlu0 %443
        %v445 = vsel %vm435, %v434, -inf
        %446 = vmax.xlane.f32.xlu0 %v445
        %v447 = vpop.xlane.xlu0 %446
        %v448 = vsub.f32 %v431, %v438
        %v449 = vsub.f32 %v432, %v441
        %v450 = vsub.f32 %v433, %v444
        %v451 = vsub.f32 %v434, %v447
        %v452 = vmul.f32 %v448, 1.442695
        %v453 = vpow.pop %v452
        %v454 = vmul.f32 %v449, 1.442695
        %v455 = vpow.pop %v454
        %v456 = vmul.f32 %v450, 1.442695
        %v457 = vpow.pop %v456
        %v458 = vmul.f32 %v451, 1.442695
        %v459 = vpow.pop %v458
        %v460 = vsel %vm435, %v453, 0.0
        %461 = vadd.xlane.f32.xlu0 %v460
        %v462 = vpop.xlane.xlu0 %461
        %v463 = vsel %vm435, %v455, 0.0
        %464 = vadd.xlane.f32.xlu0 %v463
        %v465 = vpop.xlane.xlu0 %464
        %v466 = vsel %vm435, %v457, 0.0
        %467 = vadd.xlane.f32.xlu0 %v466
        %v468 = vpop.xlane.xlu0 %467
        %v469 = vsel %vm435, %v459, 0.0
        %470 = vadd.xlane.f32.xlu0 %v469
        %v471 = vpop.xlane.xlu0 %470
        %v472 = vmax.f32 %v462, 1e-30
        %v473 = vmax.f32 %v465, 1e-30
        %v474 = vmax.f32 %v468, 1e-30
        %v475 = vmax.f32 %v471, 1e-30
        %v476 = vrcp.pop %v472
        %v477 = vrcp.pop %v473
        %v478 = vrcp.pop %v474
        %v479 = vrcp.pop %v475
        %v480 = vpack.c.bf16 %v453, %v453
        %v481 = vpack.c.bf16 %v455, %v455
        %v482 = vpack.c.bf16 %v457, %v457
        %v483 = vpack.c.bf16 %v459, %v459
        %v484 = vld [vmem:[%s3] sm:$0xf]
        %v485 = vld [vmem:[%s3 + $0x4] sm:$0xf]
        %v488 = vunpack.c.l.b16 %v484
        %v489 = vunpack.c.l.b16 %v485
        %v490 = vpack.c.b16 %v489, %v488
        %v493 = vsel %vm435, %v480, 0
        %495 = vmatprep.subr.bf16.mxu0 0
        %496 = vmatpush1.bf16.msra.mxu0 %v490
        %497 = vmatprep.subr.bf16.mxu0 0
        %498 = vmatpush1.bf16.msra.mxu0 0
        %499 = vmatprep.subr.bf16.mxu0 0
        %500 = vmatpush1.bf16.msra.mxu0 0
        %501 = vmatprep.subr.bf16.mxu0 0
        %502 = vmatpush1.bf16.msra.mxu0 0
        %503 = vmatprep.subr.bf16.mxu0 0
        %504 = vmatpush1.bf16.msra.mxu0 0
        %505 = vmatprep.subr.bf16.mxu0 0
        %506 = vmatpush1.bf16.msra.mxu0 0
        %507 = vmatprep.subr.bf16.mxu0 0
        %508 = vmatpush1.bf16.msra.mxu0 0
        %509 = vmatprep.subr.bf16.mxu0 0
        %510 = vmatpush1.bf16.msra.mxu0 0
        %511 = vmatprep.subr.bf16.mxu0 0
        %512 = vmatpush1.bf16.msra.mxu0 0
        %513 = vmatprep.subr.bf16.mxu0 0
        %514 = vmatpush1.bf16.msra.mxu0 0
        %515 = vmatprep.subr.bf16.mxu0 0
        %516 = vmatpush1.bf16.msra.mxu0 0
        %517 = vmatprep.subr.bf16.mxu0 0
        %518 = vmatpush1.bf16.msra.mxu0 0
        %519 = vmatprep.subr.bf16.mxu0 0
        %520 = vmatpush1.bf16.msra.mxu0 0
        %521 = vmatprep.subr.bf16.mxu0 0
        %522 = vmatpush1.bf16.msra.mxu0 0
        %523 = vmatprep.subr.bf16.mxu0 0
        %524 = vmatpush1.bf16.msra.mxu0 0
        %525 = vmatprep.subr.bf16.mxu0 0
        %526 = vmatpush1.bf16.msra.mxu0 0
        %527 = vmatprep.mubr.bf16.mxu0 0
        %528 = vmatmul.mubr.bf16.gmra.mrb[0].mxu0 %v493
        %v529 = vpop.f32.mrb[0].mxu0
        %v530 = vadd.f32 0.0, %v529
        %v531 = vpop.f32.mrb[0].mxu0
        %v532 = vpop.f32.mrb[0].mxu0
        %v533 = vpop.f32.mrb[0].mxu0
        %534 = vdwg.mxu0
        %v535 = vmul.f32 %v530, %v476
        %536 = vrot.lane.b32.xlu0 %v490, 96
        %v537 = vpop.permute.xlu0 %536
        %v540 = vsel %vm435, %v481, 0
        %542 = vmatprep.subr.bf16.mxu0 0
        %543 = vmatpush1.bf16.msra.mxu0 %v537
        %544 = vmatprep.subr.bf16.mxu0 0
        %545 = vmatpush1.bf16.msra.mxu0 0
        %546 = vmatprep.subr.bf16.mxu0 0
        %547 = vmatpush1.bf16.msra.mxu0 0
        %548 = vmatprep.subr.bf16.mxu0 0
        %549 = vmatpush1.bf16.msra.mxu0 0
        %550 = vmatprep.subr.bf16.mxu0 0
        %551 = vmatpush1.bf16.msra.mxu0 0
        %552 = vmatprep.subr.bf16.mxu0 0
        %553 = vmatpush1.bf16.msra.mxu0 0
        %554 = vmatprep.subr.bf16.mxu0 0
        %555 = vmatpush1.bf16.msra.mxu0 0
        %556 = vmatprep.subr.bf16.mxu0 0
        %557 = vmatpush1.bf16.msra.mxu0 0
        %558 = vmatprep.subr.bf16.mxu0 0
        %559 = vmatpush1.bf16.msra.mxu0 0
        %560 = vmatprep.subr.bf16.mxu0 0
        %561 = vmatpush1.bf16.msra.mxu0 0
        %562 = vmatprep.subr.bf16.mxu0 0
        %563 = vmatpush1.bf16.msra.mxu0 0
        %564 = vmatprep.subr.bf16.mxu0 0
        %565 = vmatpush1.bf16.msra.mxu0 0
        %566 = vmatprep.subr.bf16.mxu0 0
        %567 = vmatpush1.bf16.msra.mxu0 0
        %568 = vmatprep.subr.bf16.mxu0 0
        %569 = vmatpush1.bf16.msra.mxu0 0
        %570 = vmatprep.subr.bf16.mxu0 0
        %571 = vmatpush1.bf16.msra.mxu0 0
        %572 = vmatprep.subr.bf16.mxu0 0
        %573 = vmatpush1.bf16.msra.mxu0 0
        %574 = vmatprep.mubr.bf16.mxu0 0
        %575 = vmatmul.mubr.bf16.gmra.mrb[0].mxu0 %v540
        %v576 = vpop.f32.mrb[0].mxu0
        %v577 = vadd.f32 0.0, %v576
        %v578 = vpop.f32.mrb[0].mxu0
        %v579 = vpop.f32.mrb[0].mxu0
        %v580 = vpop.f32.mrb[0].mxu0
        %581 = vdwg.mxu0
        %v582 = vmul.f32 %v577, %v477
        %583 = vrot.lane.b32.xlu0 %v490, 64
        %v584 = vpop.permute.xlu0 %583
        %v587 = vsel %vm435, %v482, 0
        %589 = vmatprep.subr.bf16.mxu0 0
        %590 = vmatpush1.bf16.msra.mxu0 %v584
        %591 = vmatprep.subr.bf16.mxu0 0
        %592 = vmatpush1.bf16.msra.mxu0 0
        %593 = vmatprep.subr.bf16.mxu0 0
        %594 = vmatpush1.bf16.msra.mxu0 0
        %595 = vmatprep.subr.bf16.mxu0 0
        %596 = vmatpush1.bf16.msra.mxu0 0
        %597 = vmatprep.subr.bf16.mxu0 0
        %598 = vmatpush1.bf16.msra.mxu0 0
        %599 = vmatprep.subr.bf16.mxu0 0
        %600 = vmatpush1.bf16.msra.mxu0 0
        %601 = vmatprep.subr.bf16.mxu0 0
        %602 = vmatpush1.bf16.msra.mxu0 0
        %603 = vmatprep.subr.bf16.mxu0 0
        %604 = vmatpush1.bf16.msra.mxu0 0
        %605 = vmatprep.subr.bf16.mxu0 0
        %606 = vmatpush1.bf16.msra.mxu0 0
        %607 = vmatprep.subr.bf16.mxu0 0
        %608 = vmatpush1.bf16.msra.mxu0 0
        %609 = vmatprep.subr.bf16.mxu0 0
        %610 = vmatpush1.bf16.msra.mxu0 0
        %611 = vmatprep.subr.bf16.mxu0 0
        %612 = vmatpush1.bf16.msra.mxu0 0
        %613 = vmatprep.subr.bf16.mxu0 0
        %614 = vmatpush1.bf16.msra.mxu0 0
        %615 = vmatprep.subr.bf16.mxu0 0
        %616 = vmatpush1.bf16.msra.mxu0 0
        %617 = vmatprep.subr.bf16.mxu0 0
        %618 = vmatpush1.bf16.msra.mxu0 0
        %619 = vmatprep.subr.bf16.mxu0 0
        %620 = vmatpush1.bf16.msra.mxu0 0
        %621 = vmatprep.mubr.bf16.mxu0 0
        %622 = vmatmul.mubr.bf16.gmra.mrb[0].mxu0 %v587
        %v623 = vpop.f32.mrb[0].mxu0
        %v624 = vadd.f32 0.0, %v623
        %v625 = vpop.f32.mrb[0].mxu0
        %v626 = vpop.f32.mrb[0].mxu0
        %v627 = vpop.f32.mrb[0].mxu0
        %628 = vdwg.mxu0
        %v629 = vmul.f32 %v624, %v478
        %630 = vrot.lane.b32.xlu0 %v490, 32
        %v631 = vpop.permute.xlu0 %630
        %v634 = vsel %vm435, %v483, 0
        %636 = vmatprep.subr.bf16.mxu0 0
        %637 = vmatpush1.bf16.msra.mxu0 %v631
        %638 = vmatprep.subr.bf16.mxu0 0
        %639 = vmatpush1.bf16.msra.mxu0 0
        %640 = vmatprep.subr.bf16.mxu0 0
        %641 = vmatpush1.bf16.msra.mxu0 0
        %642 = vmatprep.subr.bf16.mxu0 0
        %643 = vmatpush1.bf16.msra.mxu0 0
        %644 = vmatprep.subr.bf16.mxu0 0
        %645 = vmatpush1.bf16.msra.mxu0 0
        %646 = vmatprep.subr.bf16.mxu0 0
        %647 = vmatpush1.bf16.msra.mxu0 0
        %648 = vmatprep.subr.bf16.mxu0 0
        %649 = vmatpush1.bf16.msra.mxu0 0
        %650 = vmatprep.subr.bf16.mxu0 0
        %651 = vmatpush1.bf16.msra.mxu0 0
        %652 = vmatprep.subr.bf16.mxu0 0
        %653 = vmatpush1.bf16.msra.mxu0 0
        %654 = vmatprep.subr.bf16.mxu0 0
        %655 = vmatpush1.bf16.msra.mxu0 0
        %656 = vmatprep.subr.bf16.mxu0 0
        %657 = vmatpush1.bf16.msra.mxu0 0
        %658 = vmatprep.subr.bf16.mxu0 0
        %659 = vmatpush1.bf16.msra.mxu0 0
        %660 = vmatprep.subr.bf16.mxu0 0
        %661 = vmatpush1.bf16.msra.mxu0 0
        %662 = vmatprep.subr.bf16.mxu0 0
        %663 = vmatpush1.bf16.msra.mxu0 0
        %664 = vmatprep.subr.bf16.mxu0 0
        %665 = vmatpush1.bf16.msra.mxu0 0
        %666 = vmatprep.subr.bf16.mxu0 0
        %667 = vmatpush1.bf16.msra.mxu0 0
        %668 = vmatprep.mubr.bf16.mxu0 0
        %669 = vmatmul.mubr.bf16.gmra.mrb[0].mxu0 %v634
        %v670 = vpop.f32.mrb[0].mxu0
        %v671 = vadd.f32 0.0, %v670
        %v672 = vpop.f32.mrb[0].mxu0
        %v673 = vpop.f32.mrb[0].mxu0
        %v674 = vpop.f32.mrb[0].mxu0
        %675 = vdwg.mxu0
        %v676 = vmul.f32 %v671, %v479
        %678 = vrot.lane.b32.xlu0 %v582, 32
        %v679 = vpop.permute.xlu0 %678
        %682 = vrot.lane.b32.xlu0 %v629, 64
        %v683 = vpop.permute.xlu0 %682
        %686 = vrot.lane.b32.xlu0 %v676, 96
        %v687 = vpop.permute.xlu0 %686
        %vm689 = vcmask 261120
        %v690 = vsel %vm689, %v535, %v679
        %vm691 = vcmask 523264
        %v692 = vsel %vm691, %v690, %v683
        %vm693 = vcmask 785408
        %v694 = vsel %vm693, %v692, %v687
        %v695 = vld [vmem:[%s302] sm:$0xff]
        %v696 = vadd.f32 %v694, %v695
        %v697 = vld [vmem:[%s5] sm:$0x1]
        %v699 = vlaneseq
        %v700 = vshrl.u32 %v699, 7
        %v701 = vsub.s32 0, %v700
        %v702 = vrot.slane %v697, %v701
        %v704 = vadd.f32 %v696, %v702
        %705 = vst [vmem:[%s294] sm:$0xff] %v704
        %s706 = sand.u32 %s172, 1
        %s707 = scalar_lea.sflag [#allocation4], %s706
        %s708 = sand.u32 %s172, 1
        %s709 = smul.addr %s708, 8
        %s710 = scalar_lea.vmem [#allocation5], %s709
        // Predicated region
        $region49: #{tpu_custom_call.1} parent=43 // pred_check
          %p711 = pneg %p182
        $region50: #{tpu_custom_call.1} parent=43 // pred_check_branch
          %713 = sbr.rel (%p711) target = $region52
        $region51: #{tpu_custom_call.1} parent=43 // pred_region
          %s715 = ssub.s32 128, 128
          %716 = vsyncadd %s707, %s715
          %s717 = smul.addr %s23, 128
          %s718 = scalar_lea.hbm %s6, %s717
          %s720 = sshll.u32 %s710, 4
          %s721 = int_to_ptr.vmem [resolvable:$true] %s720
          %723 = dma.vmem_to_hbm [thread:$0]  %s721, 128, %s718, %s707
        $region52: #{tpu_custom_call.1} parent=43 // pred_fallthru
          _
      $region44: #{tpu_custom_call.1} parent=5 // pred_fallthru
        _
      %p724 = scmp.le.s32.totalorder 2, %s18
      // Predicated region
      $region53: #{tpu_custom_call.1} parent=5 // pred_check
        %p725 = pneg %p724
      $region54: #{tpu_custom_call.1} parent=5 // pred_check_branch
        %727 = sbr.rel (%p725) target = $region56
      $region55: #{tpu_custom_call.1} parent=5 // pred_region
        %s728 = ssub.s32 %s18, 2
        // Predicated region
        $region57: #{tpu_custom_call.1} parent=55 // pred_check
          %p729 = pneg %p188
        $region58: #{tpu_custom_call.1} parent=55 // pred_check_branch
          %731 = sbr.rel (%p729) target = $region60
        $region59: #{tpu_custom_call.1} parent=55 // pred_region
          %s732 = sand.u32 %s173, 1
          %s733 = scalar_lea.sflag [#allocation4], %s732
          %s734 = sand.u32 %s173, 1
          %s735 = smul.addr %s734, 8
          %s736 = scalar_lea.vmem [#allocation5], %s735
          %737 = dma.done %s733, 128
        $region60: #{tpu_custom_call.1} parent=55 // pred_fallthru
          _
      $region56: #{tpu_custom_call.1} parent=5 // pred_fallthru
        _
    $region6: #{tpu_custom_call.1} parent=1 // loop_footer
      %s22 = sadd.s32 1, %s18
    $region7: #{tpu_custom_call.1} parent=1 // loop_footer_branch
      %17 = sbr.rel target = $region3
    $region8: #{tpu_custom_call.1} parent=1 // loop_exit
      _
    %738 = vsyncpa [#allocation3], 1
    %s739 = scalar_lea.sflag [#allocation3], 1
    %740 = vsyncpa %s739, 1
    %741 = vsyncpa [#allocation4], 1
    %s742 = scalar_lea.sflag [#allocation4], 1
    %743 = vsyncpa %s742, 1

</llo_original>
